<compile_context>
chip_gen: v5e
topology: v5e:2x2
jax: 0.10.0
libtpu: 0.0.40
codegen_flags: <defaults>
</compile_context>

<pallas_src>
import jax
import jax.numpy as jnp
from jax.experimental import pallas as pl
from jax.experimental.pallas import tpu as pltpu

# TODO(synk): `x1.flatten()[:, 0]` raises in PyTorch and `other` is undefined;
# we implement (x1.flatten() - OTHER).reshape(-1, 8, 8, 8) with OTHER = 0.5.
OTHER = 0.5

# ~2 MiB per block buffer; with default double buffering on input + output
# that is ~8 MiB scoped VMEM — safe on v5e (16 MiB default), v6e/v7x (32 MiB).
_BLOCK_BYTES = 2 * 1024 * 1024


def _sub_const_kernel(x_ref, o_ref):
    # x_ref / o_ref: (tile_rows, cols) tiles in VMEM. Single VPU subtract.
    o_ref[...] = x_ref[...] - jnp.asarray(OTHER, dtype=x_ref.dtype)


def _choose_view(total):
    """Lane-dense (rows, cols) 2-D view: cols % 128 == 0, prefer rows % 8 == 0."""
    for cols in (2048, 1536, 1280, 1024, 768, 640, 512, 384, 256, 128):
        if total % cols == 0 and (total // cols) % 8 == 0:
            return total // cols, cols
    # Fallback: lane-dense only (total is guaranteed divisible by 512).
    cols = 1024 if total % 1024 == 0 else 512
    return total // cols, cols


def _forward(x1: jax.Array) -> jax.Array:
    total = x1.size
    assert total % 512 == 0, "total elements must be divisible by 8*8*8"

    rows, cols = _choose_view(total)
    x2d = x1.reshape(rows, cols)  # metadata-only reshape

    itemsize = jnp.dtype(x2d.dtype).itemsize
    budget_rows = max(8, (_BLOCK_BYTES // (itemsize * cols)) // 8 * 8)
    # If the whole array fits in one ~2 MiB block, use the full extent
    # (block_shape == array dims is always legal). Otherwise tile in
    # 8-aligned row blocks; Pallas handles the partial edge block via cdiv.
    tile_rows = rows if rows <= budget_rows else budget_rows
    grid = (pl.cdiv(rows, tile_rows),)

    out2d = pl.pallas_call(
        _sub_const_kernel,
        out_shape=jax.ShapeDtypeStruct((rows, cols), x2d.dtype),
        grid=grid,
        in_specs=[pl.BlockSpec((tile_rows, cols), lambda i: (i, 0))],
        out_specs=pl.BlockSpec((tile_rows, cols), lambda i: (i, 0)),
        compiler_params=pltpu.CompilerParams(
            dimension_semantics=("parallel",)
        ),
    )(x2d)

    return out2d.reshape(-1, 8, 8, 8)  # metadata-only reshape


model_forward = jax.jit(_forward)


if __name__ == "__main__":
    key = jax.random.PRNGKey(0)
    x1 = jax.random.normal(key, (1, 3, 64, 64), dtype=jnp.float32)

    # Reference computed up front (pure JAX).
    ref = (x1.reshape(-1) - jnp.float32(OTHER)).reshape(-1, 8, 8, 8)

    v3 = model_forward(x1)
    jax.block_until_ready(v3)

    assert v3.shape == (24, 8, 8, 8), v3.shape
    assert jnp.allclose(v3, ref), "mismatch vs reference"

    print("KERNEL_OK")
</pallas_src>

<mosaic_0001>
module attributes {stable_mosaic.version = 11 : i64} {
  func.func @_sub_const_kernel(%arg0: i32, %arg1: memref<8x1536xf32, #tpu.memory_space<vmem>>, %arg2: memref<8x1536xf32, #tpu.memory_space<vmem>>) attributes {dimension_semantics = [#tpu.dimension_semantics<parallel>], iteration_bounds = array<i64: 1>, scalar_prefetch = 0 : i64, scratch_operands = 0 : i64, tpu.core_type = #tpu.core_type<tc>, window_params = [{transform_indices = @transform_0, window_bounds = array<i64: 8, 1536>}, {transform_indices = @transform_1, window_bounds = array<i64: 8, 1536>}]} {
    %c0 = arith.constant 0 : index
    %c0_0 = arith.constant 0 : index
    %0 = vector.load %arg1[%c0, %c0_0] : memref<8x1536xf32, #tpu.memory_space<vmem>>, vector<8x1536xf32>
    %cst = arith.constant 5.000000e-01 : f32
    %1 = vector.broadcast %cst : f32 to vector<8x1536xf32>
    %2 = arith.subf %0, %1 : vector<8x1536xf32>
    %c0_1 = arith.constant 0 : index
    %c0_2 = arith.constant 0 : index
    %3 = vector.load %arg2[%c0_1, %c0_2] : memref<8x1536xf32, #tpu.memory_space<vmem>>, vector<8x1536xf32>
    tpu.vector_store %arg2[%c0_1, %c0_2], %2 {strides = array<i32>} : memref<8x1536xf32, #tpu.memory_space<vmem>>, vector<8x1536xf32>,
    return
  }
  func.func @transform_0(%arg0: i32) -> (i32, i32) {
    %c0_i32 = arith.constant 0 : i32
    %c0_i32_0 = arith.constant 0 : i32
    return %arg0, %c0_i32 : i32, i32
  }
  func.func @transform_1(%arg0: i32) -> (i32, i32) {
    %c0_i32 = arith.constant 0 : i32
    %c0_i32_0 = arith.constant 0 : i32
    return %arg0, %c0_i32 : i32, i32
  }
}

</mosaic_0001>

<llo_original>
// kernel: _forward.1
$region0: #{_forward.1}
  #allocation0 [shape = 'u32[]', space=smem, size = 0x4, offset = 0x4, fixed_abs, tag = 'smem constant byte address 0x4 - core index']
  #allocation1 [shape = 'u32[72,128]{1,0:T(1,128)}', space=vmem, size = 0x9000, scoped, tag = 'internal scratch']
  %s0 = inlined_call_operand.vmem [shape: f32[8,1536], index: 0, kind: input, shape index: {}]
  %s1 = inlined_call_operand.vmem [shape: f32[8,1536], index: 1, kind: output, shape index: {}]
  %s2 = sld [smem:[#allocation0]]
  $region14: #{_forward.1} parent=0
    _
  %s4 = ssub.s32 1, %s2
  %s5 = scalar_select 0, %s4, %s2
  // Predicated region
  $region2: #{_forward.1} parent=0 // pred_check
    _
  $region3: #{_forward.1} parent=0 // pred_check_branch
    %7 = sbr.rel (0) target = $region5
  $region4: #{_forward.1} parent=0 // pred_region
    _
  $region5: #{_forward.1} parent=0 // pred_fallthru
    _
  %v8 = vld [vmem:[%s0] sm:$0xff]
  %v9 = vld [vmem:[%s0 + $0x8] sm:$0xff]
  %v10 = vld [vmem:[%s0 + $0x10] sm:$0xff]
  %v11 = vld [vmem:[%s0 + $0x18] sm:$0xff]
  %v12 = vld [vmem:[%s0 + $0x20] sm:$0xff]
  %v13 = vld [vmem:[%s0 + $0x28] sm:$0xff]
  %v14 = vld [vmem:[%s0 + $0x30] sm:$0xff]
  %v15 = vld [vmem:[%s0 + $0x38] sm:$0xff]
  %v16 = vld [vmem:[%s0 + $0x40] sm:$0xff]
  %v17 = vld [vmem:[%s0 + $0x48] sm:$0xff]
  %v18 = vld [vmem:[%s0 + $0x50] sm:$0xff]
  %v19 = vld [vmem:[%s0 + $0x58] sm:$0xff]
  %v20 = vsub.f32 %v8, 0.5
  %v21 = vsub.f32 %v9, 0.5
  %v22 = vsub.f32 %v10, 0.5
  %v23 = vsub.f32 %v11, 0.5
  %v24 = vsub.f32 %v12, 0.5
  %v25 = vsub.f32 %v13, 0.5
  %v26 = vsub.f32 %v14, 0.5
  %v27 = vsub.f32 %v15, 0.5
  %v28 = vsub.f32 %v16, 0.5
  %v29 = vsub.f32 %v17, 0.5
  %v30 = vsub.f32 %v18, 0.5
  %v31 = vsub.f32 %v19, 0.5
  %32 = vst [vmem:[%s1] sm:$0xff] %v20
  %33 = vst [vmem:[%s1 + $0x8] sm:$0xff] %v21
  %34 = vst [vmem:[%s1 + $0x10] sm:$0xff] %v22
  %35 = vst [vmem:[%s1 + $0x18] sm:$0xff] %v23
  %36 = vst [vmem:[%s1 + $0x20] sm:$0xff] %v24
  %37 = vst [vmem:[%s1 + $0x28] sm:$0xff] %v25
  %38 = vst [vmem:[%s1 + $0x30] sm:$0xff] %v26
  %39 = vst [vmem:[%s1 + $0x38] sm:$0xff] %v27
  %40 = vst [vmem:[%s1 + $0x40] sm:$0xff] %v28
  %41 = vst [vmem:[%s1 + $0x48] sm:$0xff] %v29
  %42 = vst [vmem:[%s1 + $0x50] sm:$0xff] %v30
  %43 = vst [vmem:[%s1 + $0x58] sm:$0xff] %v31
  // Predicated region
  $region6: #{_forward.1} parent=0 // pred_check
    _
  $region7: #{_forward.1} parent=0 // pred_check_branch
    %45 = sbr.rel (0) target = $region9
  $region8: #{_forward.1} parent=0 // pred_region
    _
  $region9: #{_forward.1} parent=0 // pred_fallthru
    _
  // Predicated region
  $region10: #{_forward.1} parent=0 // pred_check
    _
  $region11: #{_forward.1} parent=0 // pred_check_branch
    %47 = sbr.rel (0) target = $region13
  $region12: #{_forward.1} parent=0 // pred_region
    _
  $region13: #{_forward.1} parent=0 // pred_fallthru
    _

</llo_original>
